<compile_context>
chip_gen: v5e
topology: v5e:2x2
jax: 0.10.0
libtpu: 0.0.40
codegen_flags: <defaults>
</compile_context>

<pallas_src>
import functools

import jax
import jax.numpy as jnp
from jax.experimental import pallas as pl
from jax.experimental.pallas import tpu as pltpu


def _round_up(x, m):
    return ((x + m - 1) // m) * m


def _vmem_capacity_bytes():
    try:
        return int(pltpu.get_tpu_info().vmem_capacity_bytes)
    except Exception:
        return 64 * 1024 * 1024  # assume v7x-like (smallest VMEM)


_VMEM_BYTES = _vmem_capacity_bytes()
_BIG_VMEM = _VMEM_BYTES >= (100 << 20)          # v5e/v6e: 128 MiB; v7x: 64 MiB
_PDIST_TILE_CAP = 512 if _BIG_VMEM else 256
_MINE_TM_CAP = 512 if _BIG_VMEM else 256
_MINE_TN = 128                                   # lane-native, matches MXU
_LOSS_TILE_CAP = 256
_VMEM_LIMIT = (100 << 20) if _BIG_VMEM else (48 << 20)


def _square_tile(n, cap):
    """Single square tile for small n, cap-sized tiles otherwise."""
    if n < cap:
        t = _round_up(n, 8)
        return t, t                               # tile, npad (== tile)
    npad = _round_up(n, cap)
    return cap, npad


def _mining_tiles(n):
    """Rectangular (tm, tn) tiles + padded N for the mining kernel."""
    tn = _MINE_TN
    if n <= tn:
        t = _round_up(n, 8)
        return t, t, t
    tm = _MINE_TM_CAP
    npad = _round_up(n, tm)                       # tm is a multiple of tn
    if npad // tm < 2:                            # keep >=2 row tiles (v7x 2 TCs)
        tm //= 2
    return tm, tn, npad


# ------------------------------------------------------------------ pdist ----
def _pdist_kernel(er_ref, ec_ref, sqr_ref, sqc_ref, out_ref, *, squared, eps):
    i = pl.program_id(0)
    j = pl.program_id(1)
    # 'nt' contraction over the last dim of both operands -> no transpose.
    prod = jax.lax.dot_general(er_ref[...], ec_ref[...],
                               (((1,), (1,)), ((), ())),
                               preferred_element_type=jnp.float32)   # (tm, tn)
    res = jnp.maximum(sqr_ref[...] + sqc_ref[...] - 2.0 * prod, eps)
    if not squared:
        res = jnp.sqrt(res)

    # Single store per tile; diagonal mask folded into the diagonal-tile store.
    @pl.when(i != j)
    def _():
        out_ref[...] = res

    @pl.when(i == j)
    def _():
        tm, tn = res.shape
        rows = jax.lax.broadcasted_iota(jnp.int32, (tm, tn), 0)
        cols = jax.lax.broadcasted_iota(jnp.int32, (tm, tn), 1)
        out_ref[...] = jnp.where(rows == cols, 0.0, res)


def pdist(e, squared=False, eps=1e-12):
    """Tiled pairwise-distance matrix (matches the PyTorch pdist)."""
    n, d = e.shape
    tile, npad = _square_tile(n, _PDIST_TILE_CAP)
    e_pad = e if npad == n else jnp.zeros((npad, d), e.dtype).at[:n].set(e)
    sq = jnp.sum(e_pad.astype(jnp.float32) ** 2, axis=1)             # O(N*D), once
    sq_row = sq.reshape(npad, 1)
    sq_col = sq.reshape(1, npad)

    kernel = functools.partial(_pdist_kernel, squared=squared, eps=eps)
    # TODO(synk): for very large D (D*4B per tile approaching VMEM) add a K
    # (feature) grid axis with an f32 VMEM accumulator.
    out = pl.pallas_call(
        kernel,
        out_shape=jax.ShapeDtypeStruct((npad, npad), jnp.float32),
        grid=(npad // tile, npad // tile),
        in_specs=[pl.BlockSpec((tile, d), lambda i, j: (i, 0)),
                  pl.BlockSpec((tile, d), lambda i, j: (j, 0)),
                  pl.BlockSpec((tile, 1), lambda i, j: (i, 0)),
                  pl.BlockSpec((1, tile), lambda i, j: (0, j))],
        out_specs=pl.BlockSpec((tile, tile), lambda i, j: (i, j)),
        compiler_params=pltpu.CompilerParams(
            dimension_semantics=("parallel", "parallel"),
            vmem_limit_bytes=_VMEM_LIMIT),
    )(e_pad, e_pad, sq_row, sq_col)
    return out[:n, :n]


# ------------------------------------------- fused pdist + hard mining -------
def _pdist_mine_kernel(er_ref, ec_ref, lr_ref, lc_ref, sqr_ref, sqc_ref,
                       pos_ref, neg_ref,
                       pos_best, pos_arg, neg_best, neg_arg,
                       *, n_valid):
    i = pl.program_id(0)
    j = pl.program_id(1)
    tm = er_ref.shape[0]
    tn = ec_ref.shape[0]

    @pl.when(j == 0)
    def _():
        pos_best[...] = jnp.full_like(pos_best, -jnp.inf)
        neg_best[...] = jnp.full_like(neg_best, jnp.inf)
        pos_arg[...] = jnp.zeros_like(pos_arg)
        neg_arg[...] = jnp.zeros_like(neg_arg)

    # bf16-feed the MXU (f32 accumulation): mining only needs distance ordering.
    er = er_ref[...].astype(jnp.bfloat16)
    ec = ec_ref[...].astype(jnp.bfloat16)
    prod = jax.lax.dot_general(er, ec, (((1,), (1,)), ((), ())),
                               preferred_element_type=jnp.float32)   # (tm, tn)
    # Squared distance only (argmax/argmin are invariant under sqrt).
    d = jnp.maximum(sqr_ref[...] + sqc_ref[...] - 2.0 * prod, 1e-12)

    same = lr_ref[...] == lc_ref[...]                                # (tm, tn)
    cols_l = jax.lax.broadcasted_iota(jnp.int32, (tm, tn), 1)
    rows_l = jax.lax.broadcasted_iota(jnp.int32, (tm, tn), 0)
    off = j * tn - i * tm                                            # scalar
    is_self = rows_l == (cols_l + off)

    valid_pos = same & jnp.logical_not(is_self)
    valid_neg = jnp.logical_not(same)
    if n_valid is not None:                                          # padded cols
        col_valid = cols_l < (n_valid - j * tn)
        valid_pos = valid_pos & col_valid
        valid_neg = valid_neg & col_valid

    pos_d = jnp.where(valid_pos, d, -jnp.inf)
    neg_d = jnp.where(valid_neg, d, jnp.inf)

    # Per-tile first-occurrence argmax/argmin with int32 column indices.
    int_big = jnp.int32(2 ** 30)
    tile_pos_max = jnp.max(pos_d, axis=1, keepdims=True)             # (tm, 1)
    pos_cand = jnp.where(pos_d == tile_pos_max, cols_l, int_big)
    tile_pos_arg = j * tn + jnp.min(pos_cand, axis=1, keepdims=True)

    tile_neg_min = jnp.min(neg_d, axis=1, keepdims=True)             # (tm, 1)
    neg_cand = jnp.where(neg_d == tile_neg_min, cols_l, int_big)
    tile_neg_arg = j * tn + jnp.min(neg_cand, axis=1, keepdims=True)

    upd_p = tile_pos_max > pos_best[...]
    pos_arg[...] = jnp.where(upd_p, tile_pos_arg, pos_arg[...])
    pos_best[...] = jnp.where(upd_p, tile_pos_max, pos_best[...])

    upd_n = tile_neg_min < neg_best[...]
    neg_arg[...] = jnp.where(upd_n, tile_neg_arg, neg_arg[...])
    neg_best[...] = jnp.where(upd_n, tile_neg_min, neg_best[...])

    @pl.when(j == pl.num_programs(1) - 1)
    def _():
        pos_ref[...] = pos_arg[...]
        neg_ref[...] = neg_arg[...]


def hard_mining_indices(e, labels):
    """Hardest-positive / hardest-negative indices per anchor.

    The full NxN distance matrix stays in VMEM tile-by-tile; only the [N]
    index vectors are written to HBM.  Mining uses squared distances always.
    """
    # TODO(synk): the original PyTorch module takes an externally supplied
    # `sampler`; here we use deterministic hard mining with dist_func = pdist.
    n, d = e.shape
    tm, tn, npad = _mining_tiles(n)
    e_pad = e if npad == n else jnp.zeros((npad, d), e.dtype).at[:n].set(e)
    lab = labels.astype(jnp.int32)
    lab_pad = lab if npad == n else jnp.full((npad,), -1, jnp.int32).at[:n].set(lab)
    sq = jnp.sum(e_pad.astype(jnp.float32) ** 2, axis=1)             # O(N*D), once
    sq_row = sq.reshape(npad, 1)
    sq_col = sq.reshape(1, npad)
    lab_row = lab_pad.reshape(npad, 1)
    lab_col = lab_pad.reshape(1, npad)

    kernel = functools.partial(_pdist_mine_kernel,
                               n_valid=None if npad == n else n)
    # TODO(synk): add pipeline_mode=pl.Buffered(3) on the ec/lab_col specs if
    # profiling shows exposed DMA once per-step compute is this trimmed.
    pos, neg = pl.pallas_call(
        kernel,
        out_shape=(jax.ShapeDtypeStruct((npad, 1), jnp.int32),
                   jax.ShapeDtypeStruct((npad, 1), jnp.int32)),
        grid=(npad // tm, npad // tn),
        in_specs=[pl.BlockSpec((tm, d), lambda i, j: (i, 0)),
                  pl.BlockSpec((tn, d), lambda i, j: (j, 0)),
                  pl.BlockSpec((tm, 1), lambda i, j: (i, 0)),
                  pl.BlockSpec((1, tn), lambda i, j: (0, j)),
                  pl.BlockSpec((tm, 1), lambda i, j: (i, 0)),
                  pl.BlockSpec((1, tn), lambda i, j: (0, j))],
        out_specs=(pl.BlockSpec((tm, 1), lambda i, j: (i, 0)),
                   pl.BlockSpec((tm, 1), lambda i, j: (i, 0))),
        scratch_shapes=[pltpu.VMEM((tm, 1), jnp.float32),
                        pltpu.VMEM((tm, 1), jnp.int32),
                        pltpu.VMEM((tm, 1), jnp.float32),
                        pltpu.VMEM((tm, 1), jnp.int32)],
        compiler_params=pltpu.CompilerParams(
            dimension_semantics=("parallel", "arbitrary"),
            vmem_limit_bytes=_VMEM_LIMIT),
    )(e_pad, e_pad, lab_row, lab_col, sq_row, sq_col)
    return pos[:n, 0], neg[:n, 0]


# ------------------------------------------------- triplet margin loss -------
def _triplet_loss_kernel(a_ref, p_ref, n_ref, loss_ref, *, margin, p, eps):
    a = a_ref[...].astype(jnp.float32)
    pos = p_ref[...].astype(jnp.float32)
    neg = n_ref[...].astype(jnp.float32)
    # PyTorch F.pairwise_distance semantics: ||x1 - x2 + eps||_p, eps=1e-6.
    if p == 2:
        d_ap = jnp.sqrt(jnp.sum((a - pos + eps) ** 2, axis=1))
        d_an = jnp.sqrt(jnp.sum((a - neg + eps) ** 2, axis=1))
    else:
        d_ap = jnp.sum(jnp.abs(a - pos + eps) ** p, axis=1) ** (1.0 / p)
        d_an = jnp.sum(jnp.abs(a - neg + eps) ** p, axis=1) ** (1.0 / p)
    loss = jnp.maximum(d_ap - d_an + margin, 0.0)            # (tm,)
    loss_ref[...] = loss.reshape(1, loss.shape[0])           # lane-dense (1, tm)


def triplet_margin_loss(anchor, positive, negative, *, margin=0.2, p=2,
                        eps=1e-6):
    m, d = anchor.shape
    tile, mpad = _square_tile(m, _LOSS_TILE_CAP)

    def padrows(x):
        return x if mpad == m else jnp.zeros((mpad, d), x.dtype).at[:m].set(x)

    a, pp, nn = padrows(anchor), padrows(positive), padrows(negative)
    kernel = functools.partial(_triplet_loss_kernel, margin=margin, p=p,
                               eps=eps)
    spec = pl.BlockSpec((tile, d), lambda i: (i, 0))
    out = pl.pallas_call(
        kernel,
        out_shape=jax.ShapeDtypeStruct((1, mpad), jnp.float32),
        grid=(mpad // tile,),
        in_specs=[spec, spec, spec],
        out_specs=pl.BlockSpec((1, tile), lambda i: (0, i)),
        compiler_params=pltpu.CompilerParams(
            dimension_semantics=("parallel",),
            vmem_limit_bytes=_VMEM_LIMIT),
    )(a, pp, nn)
    return out[0, :m]


# ------------------------------------------------------------- module --------
class Triplet:
    """JAX/Pallas port of pangteen.loss.rkd._Triplet."""

    def __init__(self, p=2, margin=0.2, reduce=True, size_average=True):
        self.p = p
        self.margin = margin
        self.reduce = reduce
        self.size_average = size_average

    def __call__(self, embeddings, labels):
        # Mining always on squared distances (argmax/argmin are sqrt-invariant,
        # valid for hard-mining samplers).
        pos_idx, neg_idx = hard_mining_indices(embeddings, labels)
        # anchor_idx == arange(N): no gather needed for the anchors.
        anchor = embeddings
        # TODO(synk): positive/negative row gathers stay in XLA glue; an
        # in-kernel pl.Element(1) gather would force a one-row-per-grid-step
        # loss kernel, which costs more than the gather at large M.
        positive = embeddings[pos_idx]
        negative = embeddings[neg_idx]
        loss = triplet_margin_loss(anchor, positive, negative,
                                   margin=self.margin, p=self.p)
        if not self.reduce:
            return loss
        return jnp.mean(loss) if self.size_average else jnp.sum(loss)


# -------------------------------------------------------------- main ---------
if __name__ == "__main__":
    key = jax.random.PRNGKey(0)
    N, D = 8, 32
    embeddings = jax.random.normal(key, (N, D), dtype=jnp.float32)
    labels = jnp.array([0, 0, 1, 1, 2, 2, 3, 3], dtype=jnp.int32)

    module = Triplet(p=2, margin=0.2, reduce=True, size_average=True)
    loss = jax.block_until_ready(module(embeddings, labels))

    # ---- pure-JAX reference checks ----
    # Hard-mining reference at the kernel's working precision (bf16 MXU feed,
    # f32 accumulation, f32 precomputed norms).
    ebf = embeddings.astype(jnp.bfloat16)
    prod = jnp.dot(ebf, ebf.T, preferred_element_type=jnp.float32)
    sq = jnp.sum(embeddings * embeddings, axis=1)
    dmine = jnp.maximum(sq[:, None] + sq[None, :] - 2.0 * prod, 1e-12)
    same = labels[:, None] == labels[None, :]
    eye = jnp.eye(N, dtype=bool)
    pi_ref = jnp.argmax(jnp.where(same & ~eye, dmine, -jnp.inf), axis=1)
    ni_ref = jnp.argmin(jnp.where(~same, dmine, jnp.inf), axis=1)

    pi, ni = hard_mining_indices(embeddings, labels)
    pi, ni = jax.block_until_ready((pi, ni))
    assert jnp.array_equal(pi, pi_ref.astype(jnp.int32)), (pi, pi_ref)
    assert jnp.array_equal(ni, ni_ref.astype(jnp.int32)), (ni, ni_ref)

    a, p_, n_ = embeddings, embeddings[pi_ref], embeddings[ni_ref]
    d_ap = jnp.sqrt(jnp.sum((a - p_ + 1e-6) ** 2, axis=1))
    d_an = jnp.sqrt(jnp.sum((a - n_ + 1e-6) ** 2, axis=1))
    ref_loss = jnp.mean(jnp.maximum(d_ap - d_an + 0.2, 0.0))
    assert jnp.allclose(loss, ref_loss, rtol=1e-5, atol=1e-5), (loss, ref_loss)

    # Standalone tiled pdist kernel (the sampler dist_func), full-f32 path.
    def _ref_pdist(e, squared):
        sq_ = jnp.sum(e * e, axis=1)
        pr = e @ e.T
        r = jnp.maximum(sq_[:, None] + sq_[None, :] - 2 * pr, 1e-12)
        if not squared:
            r = jnp.sqrt(r)
        return r * (1.0 - jnp.eye(e.shape[0]))

    dist_kernel = jax.block_until_ready(pdist(embeddings, squared=True))
    assert jnp.allclose(dist_kernel, _ref_pdist(embeddings, True),
                        rtol=1e-4, atol=1e-4)

    print("KERNEL_OK")
</pallas_src>

<mosaic_0001>
module attributes {stable_mosaic.version = 11 : i64} {
  func.func @_pdist_mine_kernel(%arg0: i32, %arg1: i32, %arg2: memref<8x32xf32, #tpu.memory_space<vmem>>, %arg3: memref<8x32xf32, #tpu.memory_space<vmem>>, %arg4: memref<8x1xi32, #tpu.memory_space<vmem>>, %arg5: memref<1x8xi32, #tpu.memory_space<vmem>>, %arg6: memref<8x1xf32, #tpu.memory_space<vmem>>, %arg7: memref<1x8xf32, #tpu.memory_space<vmem>>, %arg8: memref<8x1xi32, #tpu.memory_space<vmem>>, %arg9: memref<8x1xi32, #tpu.memory_space<vmem>>, %arg10: memref<8x1xf32, #tpu.memory_space<vmem>>, %arg11: memref<8x1xi32, #tpu.memory_space<vmem>>, %arg12: memref<8x1xf32, #tpu.memory_space<vmem>>, %arg13: memref<8x1xi32, #tpu.memory_space<vmem>>) attributes {dimension_semantics = [#tpu.dimension_semantics<parallel>, #tpu.dimension_semantics<arbitrary>], iteration_bounds = array<i64: 1, 1>, scalar_prefetch = 0 : i64, scratch_operands = 4 : i64, tpu.core_type = #tpu.core_type<tc>, window_params = [{transform_indices = @transform_0, window_bounds = array<i64: 8, 32>}, {transform_indices = @transform_1, window_bounds = array<i64: 8, 32>}, {transform_indices = @transform_2, window_bounds = array<i64: 8, 1>}, {transform_indices = @transform_3, window_bounds = array<i64: 1, 8>}, {transform_indices = @transform_4, window_bounds = array<i64: 8, 1>}, {transform_indices = @transform_5, window_bounds = array<i64: 1, 8>}, {transform_indices = @transform_6, window_bounds = array<i64: 8, 1>}, {transform_indices = @transform_7, window_bounds = array<i64: 8, 1>}]} {
    %c0_i32 = arith.constant 0 : i32
    %0 = arith.cmpi eq, %arg1, %c0_i32 : i32
    %1 = arith.extui %0 : i1 to i32
    %c0_i32_0 = arith.constant 0 : i32
    %2 = arith.cmpi ne, %1, %c0_i32_0 : i32
    scf.if %2 {
      %cst_48 = arith.constant 0xFF800000 : f32
      %79 = vector.broadcast %cst_48 : f32 to vector<8x1xf32>
      %c0_49 = arith.constant 0 : index
      %c0_50 = arith.constant 0 : index
      %80 = vector.load %arg10[%c0_49, %c0_50] : memref<8x1xf32, #tpu.memory_space<vmem>>, vector<8x1xf32>
      tpu.vector_store %arg10[%c0_49, %c0_50], %79 {strides = array<i32>} : memref<8x1xf32, #tpu.memory_space<vmem>>, vector<8x1xf32>,
      %cst_51 = arith.constant 0x7F800000 : f32
      %81 = vector.broadcast %cst_51 : f32 to vector<8x1xf32>
      %c0_52 = arith.constant 0 : index
      %c0_53 = arith.constant 0 : index
      %82 = vector.load %arg12[%c0_52, %c0_53] : memref<8x1xf32, #tpu.memory_space<vmem>>, vector<8x1xf32>
      tpu.vector_store %arg12[%c0_52, %c0_53], %81 {strides = array<i32>} : memref<8x1xf32, #tpu.memory_space<vmem>>, vector<8x1xf32>,
      %c0_i32_54 = arith.constant 0 : i32
      %83 = vector.broadcast %c0_i32_54 : i32 to vector<8x1xi32>
      %c0_55 = arith.constant 0 : index
      %c0_56 = arith.constant 0 : index
      %84 = vector.load %arg11[%c0_55, %c0_56] : memref<8x1xi32, #tpu.memory_space<vmem>>, vector<8x1xi32>
      tpu.vector_store %arg11[%c0_55, %c0_56], %83 {strides = array<i32>} : memref<8x1xi32, #tpu.memory_space<vmem>>, vector<8x1xi32>,
      %c0_i32_57 = arith.constant 0 : i32
      %85 = vector.broadcast %c0_i32_57 : i32 to vector<8x1xi32>
      %c0_58 = arith.constant 0 : index
      %c0_59 = arith.constant 0 : index
      %86 = vector.load %arg13[%c0_58, %c0_59] : memref<8x1xi32, #tpu.memory_space<vmem>>, vector<8x1xi32>
      tpu.vector_store %arg13[%c0_58, %c0_59], %85 {strides = array<i32>} : memref<8x1xi32, #tpu.memory_space<vmem>>, vector<8x1xi32>,
    } else {
    }
    %c0 = arith.constant 0 : index
    %c0_1 = arith.constant 0 : index
    %3 = vector.load %arg2[%c0, %c0_1] : memref<8x32xf32, #tpu.memory_space<vmem>>, vector<8x32xf32>
    %4 = arith.truncf %3 : vector<8x32xf32> to vector<8x32xbf16>
    %c0_2 = arith.constant 0 : index
    %c0_3 = arith.constant 0 : index
    %5 = vector.load %arg3[%c0_2, %c0_3] : memref<8x32xf32, #tpu.memory_space<vmem>>, vector<8x32xf32>
    %6 = arith.truncf %5 : vector<8x32xf32> to vector<8x32xbf16>
    %cst = arith.constant dense<0.000000e+00> : vector<8x8xf32>
    %7 = tpu.matmul %4, %6, %cst {dimension_numbers = #tpu.dot_dimension_numbers<[1], [1], [0], [0], [0, 0, 1, 0], [], []>} : vector<8x32xbf16>, vector<8x32xbf16>, vector<8x8xf32> -> vector<8x8xf32>
    %c0_4 = arith.constant 0 : index
    %c0_5 = arith.constant 0 : index
    %8 = vector.load %arg6[%c0_4, %c0_5] : memref<8x1xf32, #tpu.memory_space<vmem>>, vector<8x1xf32>
    %c0_6 = arith.constant 0 : index
    %c0_7 = arith.constant 0 : index
    %9 = vector.load %arg7[%c0_6, %c0_7] : memref<1x8xf32, #tpu.memory_space<vmem>>, vector<1x8xf32>
    %10 = vector.broadcast %8 : vector<8x1xf32> to vector<8x8xf32>
    %11 = vector.broadcast %9 : vector<1x8xf32> to vector<8x8xf32>
    %12 = arith.addf %10, %11 : vector<8x8xf32>
    %cst_8 = arith.constant 2.000000e+00 : f32
    %13 = vector.broadcast %cst_8 : f32 to vector<8x8xf32>
    %14 = arith.mulf %13, %7 : vector<8x8xf32>
    %15 = arith.subf %12, %14 : vector<8x8xf32>
    %cst_9 = arith.constant 9.99999996E-13 : f32
    %16 = vector.broadcast %cst_9 : f32 to vector<8x8xf32>
    %17 = arith.maximumf %15, %16 : vector<8x8xf32>
    %c0_10 = arith.constant 0 : index
    %c0_11 = arith.constant 0 : index
    %18 = vector.load %arg4[%c0_10, %c0_11] : memref<8x1xi32, #tpu.memory_space<vmem>>, vector<8x1xi32>
    %c0_12 = arith.constant 0 : index
    %c0_13 = arith.constant 0 : index
    %19 = vector.load %arg5[%c0_12, %c0_13] : memref<1x8xi32, #tpu.memory_space<vmem>>, vector<1x8xi32>
    %20 = vector.broadcast %18 : vector<8x1xi32> to vector<8x8xi32>
    %21 = vector.broadcast %19 : vector<1x8xi32> to vector<8x8xi32>
    %22 = arith.cmpi eq, %20, %21 : vector<8x8xi32>
    %23 = tpu.iota {dimensions = array<i32: 1>} : vector<8x8xi32>
    %24 = tpu.iota {dimensions = array<i32: 0>} : vector<8x8xi32>
    %c8_i32 = arith.constant 8 : i32
    %25 = arith.muli %arg1, %c8_i32 : i32
    %c8_i32_14 = arith.constant 8 : i32
    %26 = arith.muli %arg0, %c8_i32_14 : i32
    %27 = arith.subi %25, %26 : i32
    %28 = vector.broadcast %27 : i32 to vector<8x8xi32>
    %29 = arith.addi %23, %28 : vector<8x8xi32>
    %30 = arith.cmpi eq, %24, %29 : vector<8x8xi32>
    %cst_15 = arith.constant dense<true> : vector<8x8xi1>
    %31 = arith.xori %30, %cst_15 : vector<8x8xi1>
    %32 = arith.andi %22, %31 : vector<8x8xi1>
    %cst_16 = arith.constant dense<true> : vector<8x8xi1>
    %33 = arith.xori %22, %cst_16 : vector<8x8xi1>
    %cst_17 = arith.constant 0xFF800000 : f32
    %34 = vector.broadcast %cst_17 : f32 to vector<8x8xf32>
    %35 = arith.select %32, %17, %34 : vector<8x8xi1>, vector<8x8xf32>
    %cst_18 = arith.constant 0x7F800000 : f32
    %36 = vector.broadcast %cst_18 : f32 to vector<8x8xf32>
    %37 = arith.select %33, %17, %36 : vector<8x8xi1>, vector<8x8xf32>
    %cst_19 = arith.constant dense<0xFF800000> : vector<8xf32>
    %38 = vector.multi_reduction <maximumf>, %35, %cst_19 [1] : vector<8x8xf32> to vector<8xf32>
    %39 = vector.shape_cast %38 : vector<8xf32> to vector<8x1xf32>
    %40 = vector.broadcast %39 : vector<8x1xf32> to vector<8x8xf32>
    %41 = arith.cmpf oeq, %35, %40 : vector<8x8xf32>
    %c1073741824_i32 = arith.constant 1073741824 : i32
    %42 = vector.broadcast %c1073741824_i32 : i32 to vector<8x8xi32>
    %43 = arith.select %41, %23, %42 : vector<8x8xi1>, vector<8x8xi32>
    %c8_i32_20 = arith.constant 8 : i32
    %44 = arith.muli %arg1, %c8_i32_20 : i32
    %cst_21 = arith.constant dense<2147483647> : vector<8xi32>
    %45 = vector.multi_reduction <minsi>, %43, %cst_21 [1] : vector<8x8xi32> to vector<8xi32>
    %46 = vector.shape_cast %45 : vector<8xi32> to vector<8x1xi32>
    %47 = vector.broadcast %44 : i32 to vector<8x1xi32>
    %48 = arith.addi %47, %46 : vector<8x1xi32>
    %cst_22 = arith.constant dense<0x7F800000> : vector<8xf32>
    %49 = vector.multi_reduction <minimumf>, %37, %cst_22 [1] : vector<8x8xf32> to vector<8xf32>
    %50 = vector.shape_cast %49 : vector<8xf32> to vector<8x1xf32>
    %51 = vector.broadcast %50 : vector<8x1xf32> to vector<8x8xf32>
    %52 = arith.cmpf oeq, %37, %51 : vector<8x8xf32>
    %c1073741824_i32_23 = arith.constant 1073741824 : i32
    %53 = vector.broadcast %c1073741824_i32_23 : i32 to vector<8x8xi32>
    %54 = arith.select %52, %23, %53 : vector<8x8xi1>, vector<8x8xi32>
    %c8_i32_24 = arith.constant 8 : i32
    %55 = arith.muli %arg1, %c8_i32_24 : i32
    %cst_25 = arith.constant dense<2147483647> : vector<8xi32>
    %56 = vector.multi_reduction <minsi>, %54, %cst_25 [1] : vector<8x8xi32> to vector<8xi32>
    %57 = vector.shape_cast %56 : vector<8xi32> to vector<8x1xi32>
    %58 = vector.broadcast %55 : i32 to vector<8x1xi32>
    %59 = arith.addi %58, %57 : vector<8x1xi32>
    %c0_26 = arith.constant 0 : index
    %c0_27 = arith.constant 0 : index
    %60 = vector.load %arg10[%c0_26, %c0_27] : memref<8x1xf32, #tpu.memory_space<vmem>>, vector<8x1xf32>
    %61 = arith.cmpf ogt, %39, %60 : vector<8x1xf32>
    %c0_28 = arith.constant 0 : index
    %c0_29 = arith.constant 0 : index
    %62 = vector.load %arg11[%c0_28, %c0_29] : memref<8x1xi32, #tpu.memory_space<vmem>>, vector<8x1xi32>
    %63 = arith.select %61, %48, %62 : vector<8x1xi1>, vector<8x1xi32>
    %c0_30 = arith.constant 0 : index
    %c0_31 = arith.constant 0 : index
    %64 = vector.load %arg11[%c0_30, %c0_31] : memref<8x1xi32, #tpu.memory_space<vmem>>, vector<8x1xi32>
    tpu.vector_store %arg11[%c0_30, %c0_31], %63 {strides = array<i32>} : memref<8x1xi32, #tpu.memory_space<vmem>>, vector<8x1xi32>,
    %c0_32 = arith.constant 0 : index
    %c0_33 = arith.constant 0 : index
    %65 = vector.load %arg10[%c0_32, %c0_33] : memref<8x1xf32, #tpu.memory_space<vmem>>, vector<8x1xf32>
    %66 = arith.select %61, %39, %65 : vector<8x1xi1>, vector<8x1xf32>
    %c0_34 = arith.constant 0 : index
    %c0_35 = arith.constant 0 : index
    %67 = vector.load %arg10[%c0_34, %c0_35] : memref<8x1xf32, #tpu.memory_space<vmem>>, vector<8x1xf32>
    tpu.vector_store %arg10[%c0_34, %c0_35], %66 {strides = array<i32>} : memref<8x1xf32, #tpu.memory_space<vmem>>, vector<8x1xf32>,
    %c0_36 = arith.constant 0 : index
    %c0_37 = arith.constant 0 : index
    %68 = vector.load %arg12[%c0_36, %c0_37] : memref<8x1xf32, #tpu.memory_space<vmem>>, vector<8x1xf32>
    %69 = arith.cmpf olt, %50, %68 : vector<8x1xf32>
    %c0_38 = arith.constant 0 : index
    %c0_39 = arith.constant 0 : index
    %70 = vector.load %arg13[%c0_38, %c0_39] : memref<8x1xi32, #tpu.memory_space<vmem>>, vector<8x1xi32>
    %71 = arith.select %69, %59, %70 : vector<8x1xi1>, vector<8x1xi32>
    %c0_40 = arith.constant 0 : index
    %c0_41 = arith.constant 0 : index
    %72 = vector.load %arg13[%c0_40, %c0_41] : memref<8x1xi32, #tpu.memory_space<vmem>>, vector<8x1xi32>
    tpu.vector_store %arg13[%c0_40, %c0_41], %71 {strides = array<i32>} : memref<8x1xi32, #tpu.memory_space<vmem>>, vector<8x1xi32>,
    %c0_42 = arith.constant 0 : index
    %c0_43 = arith.constant 0 : index
    %73 = vector.load %arg12[%c0_42, %c0_43] : memref<8x1xf32, #tpu.memory_space<vmem>>, vector<8x1xf32>
    %74 = arith.select %69, %50, %73 : vector<8x1xi1>, vector<8x1xf32>
    %c0_44 = arith.constant 0 : index
    %c0_45 = arith.constant 0 : index
    %75 = vector.load %arg12[%c0_44, %c0_45] : memref<8x1xf32, #tpu.memory_space<vmem>>, vector<8x1xf32>
    tpu.vector_store %arg12[%c0_44, %c0_45], %74 {strides = array<i32>} : memref<8x1xf32, #tpu.memory_space<vmem>>, vector<8x1xf32>,
    %c0_i32_46 = arith.constant 0 : i32
    %76 = arith.cmpi eq, %arg1, %c0_i32_46 : i32
    %77 = arith.extui %76 : i1 to i32
    %c0_i32_47 = arith.constant 0 : i32
    %78 = arith.cmpi ne, %77, %c0_i32_47 : i32
    scf.if %78 {
      %c0_48 = arith.constant 0 : index
      %c0_49 = arith.constant 0 : index
      %79 = vector.load %arg11[%c0_48, %c0_49] : memref<8x1xi32, #tpu.memory_space<vmem>>, vector<8x1xi32>
      %c0_50 = arith.constant 0 : index
      %c0_51 = arith.constant 0 : index
      %80 = vector.load %arg8[%c0_50, %c0_51] : memref<8x1xi32, #tpu.memory_space<vmem>>, vector<8x1xi32>
      tpu.vector_store %arg8[%c0_50, %c0_51], %79 {strides = array<i32>} : memref<8x1xi32, #tpu.memory_space<vmem>>, vector<8x1xi32>,
      %c0_52 = arith.constant 0 : index
      %c0_53 = arith.constant 0 : index
      %81 = vector.load %arg13[%c0_52, %c0_53] : memref<8x1xi32, #tpu.memory_space<vmem>>, vector<8x1xi32>
      %c0_54 = arith.constant 0 : index
      %c0_55 = arith.constant 0 : index
      %82 = vector.load %arg9[%c0_54, %c0_55] : memref<8x1xi32, #tpu.memory_space<vmem>>, vector<8x1xi32>
      tpu.vector_store %arg9[%c0_54, %c0_55], %81 {strides = array<i32>} : memref<8x1xi32, #tpu.memory_space<vmem>>, vector<8x1xi32>,
    } else {
    }
    return
  }
  func.func @transform_0(%arg0: i32, %arg1: i32) -> (i32, i32) {
    %c0_i32 = arith.constant 0 : i32
    %c0_i32_0 = arith.constant 0 : i32
    return %arg0, %c0_i32 : i32, i32
  }
  func.func @transform_1(%arg0: i32, %arg1: i32) -> (i32, i32) {
    %c0_i32 = arith.constant 0 : i32
    %c0_i32_0 = arith.constant 0 : i32
    return %arg1, %c0_i32 : i32, i32
  }
  func.func @transform_2(%arg0: i32, %arg1: i32) -> (i32, i32) {
    %c0_i32 = arith.constant 0 : i32
    %c0_i32_0 = arith.constant 0 : i32
    return %arg0, %c0_i32 : i32, i32
  }
  func.func @transform_3(%arg0: i32, %arg1: i32) -> (i32, i32) {
    %c0_i32 = arith.constant 0 : i32
    %c0_i32_0 = arith.constant 0 : i32
    return %c0_i32, %arg1 : i32, i32
  }
  func.func @transform_4(%arg0: i32, %arg1: i32) -> (i32, i32) {
    %c0_i32 = arith.constant 0 : i32
    %c0_i32_0 = arith.constant 0 : i32
    return %arg0, %c0_i32 : i32, i32
  }
  func.func @transform_5(%arg0: i32, %arg1: i32) -> (i32, i32) {
    %c0_i32 = arith.constant 0 : i32
    %c0_i32_0 = arith.constant 0 : i32
    return %c0_i32, %arg1 : i32, i32
  }
  func.func @transform_6(%arg0: i32, %arg1: i32) -> (i32, i32) {
    %c0_i32 = arith.constant 0 : i32
    %c0_i32_0 = arith.constant 0 : i32
    return %arg0, %c0_i32 : i32, i32
  }
  func.func @transform_7(%arg0: i32, %arg1: i32) -> (i32, i32) {
    %c0_i32 = arith.constant 0 : i32
    %c0_i32_0 = arith.constant 0 : i32
    return %arg0, %c0_i32 : i32, i32
  }
}

</mosaic_0001>

<llo_original>
// kernel: tpu_custom_call.1
$region0: #{tpu_custom_call.1}
  #allocation0 [shape = 'u32[]', space=smem, size = 0x4, offset = 0x4, fixed_abs, tag = 'smem constant byte address 0x4 - core index']
  #allocation1 [shape = 'u32[72,128]{1,0:T(1,128)}', space=vmem, size = 0x9000, scoped, tag = 'internal scratch']
  #allocation2 [shape = 'f32[8,1]{1,0:T(8,128)}', space=vmem, size = 0x1000, scoped, tag = 'scratch operand']
  #allocation3 [shape = 's32[8,1]{1,0:T(8,128)}', space=vmem, size = 0x1000, scoped, tag = 'scratch operand']
  #allocation4 [shape = 'f32[8,1]{1,0:T(8,128)}', space=vmem, size = 0x1000, scoped, tag = 'scratch operand']
  #allocation5 [shape = 's32[8,1]{1,0:T(8,128)}', space=vmem, size = 0x1000, scoped, tag = 'scratch operand']
  %s0 = inlined_call_operand.vmem [shape: f32[8,32], index: 0, kind: input, shape index: {}]
  %s1 = inlined_call_operand.vmem [shape: f32[8,32], index: 1, kind: input, shape index: {}]
  %s2 = inlined_call_operand.vmem [shape: s32[8,1], index: 2, kind: input, shape index: {}]
  %s3 = inlined_call_operand.vmem [shape: s32[1,8], index: 3, kind: input, shape index: {}]
  %s4 = inlined_call_operand.vmem [shape: f32[8,1], index: 4, kind: input, shape index: {}]
  %s5 = inlined_call_operand.vmem [shape: f32[1,8], index: 5, kind: input, shape index: {}]
  %s6 = inlined_call_operand.vmem [shape: s32[8,1], index: 6, kind: output, shape index: {0}]
  %s7 = inlined_call_operand.vmem [shape: s32[8,1], index: 7, kind: output, shape index: {1}]
  %8 = xla_tuple %s6, %s7
  %s9 = sld [smem:[#allocation0]]
  $region50: #{tpu_custom_call.1} parent=0
    _
  %s11 = ssub.s32 1, %s9
  %s12 = scalar_select 0, %s11, %s9
  // Predicated region
  $region2: #{tpu_custom_call.1} parent=0 // pred_check
    _
  $region3: #{tpu_custom_call.1} parent=0 // pred_check_branch
    %14 = sbr.rel (0) target = $region5
  $region4: #{tpu_custom_call.1} parent=0 // pred_region
    _
  $region5: #{tpu_custom_call.1} parent=0 // pred_fallthru
    _
  // Predicated region
  $region6: #{tpu_custom_call.1} parent=0 // pred_check
    _
  $region7: #{tpu_custom_call.1} parent=0 // pred_check_branch
    %16 = sbr.rel (0) target = $region9
  $region8: #{tpu_custom_call.1} parent=0 // pred_region
    _
  $region9: #{tpu_custom_call.1} parent=0 // pred_fallthru
    _
  // Predicated region
  $region10: #{tpu_custom_call.1} parent=0 // pred_check
    _
  $region11: #{tpu_custom_call.1} parent=0 // pred_check_branch
    %18 = sbr.rel (0) target = $region13
  $region12: #{tpu_custom_call.1} parent=0 // pred_region
    _
  $region13: #{tpu_custom_call.1} parent=0 // pred_fallthru
    _
  // Predicated region
  $region14: #{tpu_custom_call.1} parent=0 // pred_check
    _
  $region15: #{tpu_custom_call.1} parent=0 // pred_check_branch
    %20 = sbr.rel (0) target = $region17
  $region16: #{tpu_custom_call.1} parent=0 // pred_region
    _
  $region17: #{tpu_custom_call.1} parent=0 // pred_fallthru
    _
  // Predicated region
  $region18: #{tpu_custom_call.1} parent=0 // pred_check
    _
  $region19: #{tpu_custom_call.1} parent=0 // pred_check_branch
    %22 = sbr.rel (0) target = $region21
  $region20: #{tpu_custom_call.1} parent=0 // pred_region
    _
  $region21: #{tpu_custom_call.1} parent=0 // pred_fallthru
    _
  // Predicated region
  $region22: #{tpu_custom_call.1} parent=0 // pred_check
    _
  $region23: #{tpu_custom_call.1} parent=0 // pred_check_branch
    %24 = sbr.rel (0) target = $region25
  $region24: #{tpu_custom_call.1} parent=0 // pred_region
    _
  $region25: #{tpu_custom_call.1} parent=0 // pred_fallthru
    _
  %p26 = scmp.eq.s32.totalorder 0, 0
  // Predicated region
  $region26: #{tpu_custom_call.1} parent=0 // pred_check
    %p27 = pneg %p26
  $region27: #{tpu_custom_call.1} parent=0 // pred_check_branch
    %29 = sbr.rel (%p27) target = $region29
  $region28: #{tpu_custom_call.1} parent=0 // pred_region
    %vm30 = vcmask 7168
    %31 = vst.msk [vmem:[#allocation2] sm:$0xff] %vm30, -inf
    %32 = vst.msk [vmem:[#allocation4] sm:$0xff] %vm30, inf
    %33 = vst.msk [vmem:[#allocation3] sm:$0xff] %vm30, 0
    %34 = vst.msk [vmem:[#allocation5] sm:$0xff] %vm30, 0
  $region29: #{tpu_custom_call.1} parent=0 // pred_fallthru
    _
  %v35 = vld [vmem:[%s0] sm:$0xff]
  %v36 = vpack.c.bf16 %v35, %v35
  %v37 = vld [vmem:[%s1] sm:$0xff]
  %v38 = vpack.c.bf16 %v37, %v37
  %vm39 = vcmask 261120
  %v41 = vsel %vm39, %v36, 0
  %v44 = vsel %vm39, %v38, 0
  %46 = vmatpush.bf16.xpose.msra.mxu0 0
  %47 = vmatpush.bf16.xpose.msra.mxu0 0
  %48 = vmatpush.bf16.xpose.msra.mxu0 0
  %49 = vmatpush.bf16.xpose.msra.mxu0 0
  %50 = vmatpush.bf16.xpose.msra.mxu0 0
  %51 = vmatpush.bf16.xpose.msra.mxu0 0
  %52 = vmatpush.bf16.xpose.msra.mxu0 0
  %53 = vmatpush.bf16.xpose.msra.mxu0 %v44
  %54 = vmatmul.bf16.gmra.mxu0 %v41
  %v55 = vpop.f32.mrf.mxu0
  %v56 = vadd.f32 0.0, %v55
  %v57 = vpop.f32.mrf.mxu0
  %58 = vdwg.mxu0
  %v59 = vld [vmem:[%s4] sm:$0xff]
  %v60 = vld [vmem:[%s5] sm:$0x1]
  %62 = vset.pattern.permute.xlu0 0
  %63 = vperm.xlu0 %62, %v59
  %v64 = vpop.permute.xlu0 %63
  %v67 = vperm.slane %v60, 0
  %v69 = vadd.f32 %v64, %v67
  %v70 = vmul.f32 %v56, 2.0
  %v71 = vsub.f32 %v69, %v70
  %v72 = vmax.f32 %v71, 1e-12
  %v73 = vld [vmem:[%s2] sm:$0xff]
  %v74 = vld [vmem:[%s3] sm:$0x1]
  %75 = vset.pattern.permute.xlu0 0
  %76 = vperm.xlu0 %75, %v73
  %v77 = vpop.permute.xlu0 %76
  %v78 = vperm.slane %v74, 0
  %vm79 = vcmp.eq.s32.totalorder %v77, %v78
  %v80 = vlaneseq
  %v81 = vand.u32 %v80, 127
  %v82 = vlaneseq
  %v83 = vshrl.u32 %v82, 7
  %s84 = smul.u32 0, 8
  %s85 = smul.u32 0, 8
  %s86 = ssub.s32 %s84, %s85
  %v87 = vstv %s86
  %v88 = vadd.s32 %v81, %v87
  %vm89 = vcmp.eq.s32.totalorder %v83, %v88
  %vm90 = vmxor %vm89, 1
  %vm91 = vmand %vm79, %vm90
  %vm92 = vmxor %vm79, 1
  %v93 = vsel %vm91, %v72, -inf
  %v94 = vsel %vm92, %v72, inf
  %vm95 = vcmask 64512
  %v96 = vsel %vm95, %v93, -inf
  %97 = vmax.xlane.f32.xlu0 %v96
  %v98 = vpop.xlane.xlu0 %97
  %vm99 = vcmp.eq.f32.partialorder %v93, %v98
  %v100 = vsel %vm99, %v81, 1073741824
  %v101 = vsel %vm95, %v100, 2147483647
  %v102 = vand.u32 %v101, 65535
  %v103 = vshra.s32 %v101, 16
  %v104 = vcvt.s32.f32 %v102
  %v105 = vcvt.s32.f32 %v103
  %106 = vmin.xlane.f32.xlu0 %v105
  %v107 = vpop.xlane.xlu0 %106
  %vm108 = vcmp.eq.f32.partialorder %v105, %v107
  %v109 = vsel %vm108, %v104, inf
  %110 = vmin.xlane.f32.xlu0 %v109
  %v111 = vpop.xlane.xlu0 %110
  %v112 = vcvt.f32.s32 %v111
  %v113 = vcvt.f32.s32 %v107
  %v114 = vshll.u32 %v113, 16
  %v115 = vadd.s32 %v114, %v112
  %v116 = vstv %s84
  %v117 = vadd.s32 %v116, %v115
  %v118 = vsel %vm95, %v94, inf
  %119 = vmin.xlane.f32.xlu0 %v118
  %v120 = vpop.xlane.xlu0 %119
  %vm121 = vcmp.eq.f32.partialorder %v94, %v120
  %v122 = vsel %vm121, %v81, 1073741824
  %v123 = vsel %vm95, %v122, 2147483647
  %v124 = vand.u32 %v123, 65535
  %v125 = vshra.s32 %v123, 16
  %v126 = vcvt.s32.f32 %v124
  %v127 = vcvt.s32.f32 %v125
  %128 = vmin.xlane.f32.xlu0 %v127
  %v129 = vpop.xlane.xlu0 %128
  %vm130 = vcmp.eq.f32.partialorder %v127, %v129
  %v131 = vsel %vm130, %v126, inf
  %132 = vmin.xlane.f32.xlu0 %v131
  %v133 = vpop.xlane.xlu0 %132
  %v134 = vcvt.f32.s32 %v133
  %v135 = vcvt.f32.s32 %v129
  %v136 = vshll.u32 %v135, 16
  %v137 = vadd.s32 %v136, %v134
  %v138 = vadd.s32 %v116, %v137
  %v139 = vld [vmem:[#allocation2] sm:$0xff]
  %vm140 = vcmp.gt.f32.partialorder %v98, %v139
  %v141 = vld [vmem:[#allocation3] sm:$0xff]
  %v142 = vsel %vm140, %v117, %v141
  %vm143 = vcmask 7168
  %144 = vst.msk [vmem:[#allocation3] sm:$0xff] %vm143, %v142
  %v145 = vld [vmem:[#allocation2] sm:$0xff]
  %v146 = vsel %vm140, %v98, %v145
  %147 = vst.msk [vmem:[#allocation2] sm:$0xff] %vm143, %v146
  %v148 = vld [vmem:[#allocation4] sm:$0xff]
  %vm149 = vcmp.lt.f32.partialorder %v120, %v148
  %v150 = vld [vmem:[#allocation5] sm:$0xff]
  %v151 = vsel %vm149, %v138, %v150
  %152 = vst.msk [vmem:[#allocation5] sm:$0xff] %vm143, %v151
  %v153 = vld [vmem:[#allocation4] sm:$0xff]
  %v154 = vsel %vm149, %v120, %v153
  %155 = vst.msk [vmem:[#allocation4] sm:$0xff] %vm143, %v154
  // Predicated region
  $region30: #{tpu_custom_call.1} parent=0 // pred_check
    %p156 = pneg %p26
  $region31: #{tpu_custom_call.1} parent=0 // pred_check_branch
    %158 = sbr.rel (%p156) target = $region33
  $region32: #{tpu_custom_call.1} parent=0 // pred_region
    %v159 = vld [vmem:[#allocation3] sm:$0xff]
    %160 = vst.msk [vmem:[%s6] sm:$0xff] %vm143, %v159
    %v161 = vld [vmem:[#allocation5] sm:$0xff]
    %162 = vst.msk [vmem:[%s7] sm:$0xff] %vm143, %v161
  $region33: #{tpu_custom_call.1} parent=0 // pred_fallthru
    _
  // Predicated region
  $region34: #{tpu_custom_call.1} parent=0 // pred_check
    _
  $region35: #{tpu_custom_call.1} parent=0 // pred_check_branch
    %164 = sbr.rel (0) target = $region37
  $region36: #{tpu_custom_call.1} parent=0 // pred_region
    _
  $region37: #{tpu_custom_call.1} parent=0 // pred_fallthru
    _
  // Predicated region
  $region38: #{tpu_custom_call.1} parent=0 // pred_check
    _
  $region39: #{tpu_custom_call.1} parent=0 // pred_check_branch
    %166 = sbr.rel (0) target = $region41
  $region40: #{tpu_custom_call.1} parent=0 // pred_region
    _
  $region41: #{tpu_custom_call.1} parent=0 // pred_fallthru
    _
  // Predicated region
  $region42: #{tpu_custom_call.1} parent=0 // pred_check
    _
  $region43: #{tpu_custom_call.1} parent=0 // pred_check_branch
    %168 = sbr.rel (0) target = $region45
  $region44: #{tpu_custom_call.1} parent=0 // pred_region
    _
  $region45: #{tpu_custom_call.1} parent=0 // pred_fallthru
    _
  // Predicated region
  $region46: #{tpu_custom_call.1} parent=0 // pred_check
    _
  $region47: #{tpu_custom_call.1} parent=0 // pred_check_branch
    %170 = sbr.rel (0) target = $region49
  $region48: #{tpu_custom_call.1} parent=0 // pred_region
    _
  $region49: #{tpu_custom_call.1} parent=0 // pred_fallthru
    _

</llo_original>
